<compile_context>
chip_gen: v5e
topology: v5e:2x2
jax: 0.10.0
libtpu: 0.0.40
codegen_flags: <defaults>
</compile_context>

<pallas_src>
import jax
import jax.numpy as jnp
from jax import lax
from jax.experimental import pallas as pl
from jax.experimental.pallas import tpu as pltpu


def _round_up(x, m):
    return (x + m - 1) // m * m


def _cdiv(a, b):
    return -(-a // b)


def _tile_bytes(shape, itemsize):
    """VMEM footprint estimate with (sublane, 128-lane) tile padding."""
    shape = tuple(int(d) for d in shape)
    if len(shape) == 1:
        shape = (1,) + shape
    lead = 1
    for d in shape[:-2]:
        lead *= d
    sub = 8 * (4 // itemsize)            # 8 rows per tile for f32, 16 for bf16
    return lead * _round_up(shape[-2], sub) * _round_up(shape[-1], 128) * itemsize


# -----------------------------------------------------------------------------
# Galerkin / Fourier(deg) weight expansion -- plain jnp (tiny; fused by XLA).
#   w[j] = sum_d coeffs[j,d,0]*cos(theta*n_d) + coeffs[j,d,1]*sin(theta*n_d),
#   n_d = torch.linspace(0, deg, deg)[d],  theta = s*dilation + shift.
# -----------------------------------------------------------------------------
def galerkin_fourier_weights(theta, coeffs):
    deg = coeffs.shape[1]
    n_range = jnp.linspace(0.0, float(deg), deg, dtype=jnp.float32)
    return jnp.sum(coeffs[:, :, 0] * jnp.cos(theta * n_range)
                   + coeffs[:, :, 1] * jnp.sin(theta * n_range), axis=1)


# -----------------------------------------------------------------------------
# conv2d (NCHW semantics) with the im2col fused into the Pallas kernel.
# -----------------------------------------------------------------------------
def gal_conv2d_pallas(x_nchw, weight, bias, stride, padding,
                      row_block=None, compute_dtype=jnp.bfloat16):
    B, C, H, W = x_nchw.shape
    OC, IC, KH, KW = weight.shape
    assert C == IC, (C, IC)
    OH = (H + 2 * padding - KH) // stride + 1
    OW = (W + 2 * padding - KW) // stride + 1
    assert OH > 0 and OW > 0

    itemsize = jnp.dtype(compute_dtype).itemsize
    sub_align = 8 * (4 // itemsize)              # sublane tile: 8 (f32) / 16 (bf16)

    C_pad = _round_up(C, 8)                      # contraction sub-chunk
    OW_p = _round_up(OW, sub_align)              # sublane-aligned output width
    # Lane-dense OC only pays off for wide OC; for tiny OC keep exact width so
    # we don't write (and later slice/transpose) 32x padded output bytes.
    OC_store = _round_up(OC, 128) if OC >= 64 else OC
    K_flat = KH * KW * C_pad

    # ---- generation-aware VMEM budget -------------------------------------
    try:
        vmem_cap = int(pltpu.get_tpu_info().vmem_capacity_bytes)
    except Exception:
        vmem_cap = 64 * 1024 * 1024              # conservative (v7x per-TC)
    budget = vmem_cap - 16 * 1024 * 1024         # headroom for compiler scratch

    if row_block is None:
        row_block = 32
    T_OH = max(1, min(OH, row_block))

    def _plan(t_oh):
        nrb = _cdiv(OH, t_oh)
        oh_pad = nrb * t_oh
        h_work = max(H + 2 * padding, (oh_pad - 1) * stride + KH)
        w_work = max(W + 2 * padding, (OW_p - 1) * stride + KW)
        strip_h = (t_oh - 1) * stride + KH
        m = t_oh * OW_p
        x_blk = _tile_bytes((h_work, w_work, C_pad), itemsize)
        w_blk = _tile_bytes((K_flat, OC_store), itemsize)
        b_blk = _tile_bytes((1, OC_store), 4)
        o_blk = _tile_bytes((t_oh, OW_p, OC_store), 4)
        live = (_tile_bytes((strip_h, w_work, C_pad), itemsize)    # strip value
                + _tile_bytes((m, K_flat), itemsize)               # im2col slab
                + _tile_bytes((m, OC_store), 4))                   # f32 result
        # Input/output/weight/bias blocks are double-buffered by the pipeline
        # (no x2 double-counting on top of that).
        # TODO(synk): pipeline_mode=pl.Buffered(1) on the constant-index weight
        # and bias specs would drop their second buffer for large channel counts.
        work = 2 * (x_blk + w_blk + b_blk + o_blk) + live + (2 << 20)
        return nrb, oh_pad, h_work, w_work, strip_h, work

    nrb, OH_pad, H_work, W_work, STRIP_H, work_bytes = _plan(T_OH)
    while work_bytes > budget and T_OH > 1:
        T_OH = max(1, T_OH // 2)
        nrb, OH_pad, H_work, W_work, STRIP_H, work_bytes = _plan(T_OH)
    # TODO(synk): for very large H*W*C the full padded image no longer fits VMEM
    # even with T_OH=1; tile H with an explicit halo (manual make_async_copy or
    # pl.Element index map) and add a channel-block grid axis instead of shipping
    # the whole image per batch element.
    assert work_bytes <= budget, (
        f"per-step VMEM working set {work_bytes} B exceeds budget {budget} B")
    vmem_limit = int(min(budget, max(work_bytes + (4 << 20), 32 * 1024 * 1024)))

    M = T_OH * OW_p

    # ---- data prep (wrapper-side; fused by XLA with the pad/transpose) -----
    x_nhwc = jnp.transpose(x_nchw, (0, 2, 3, 1)).astype(compute_dtype)
    x_nhwc = jnp.pad(
        x_nhwc,
        ((0, 0),
         (padding, H_work - H - padding),
         (padding, W_work - W - padding),
         (0, C_pad - C)))                                   # (B, H_work, W_work, C_pad)

    # Weight flattened to (KH*KW*C_pad, OC_store), tap-major then channel, which
    # matches the slab column order built in-kernel.
    w_mat = jnp.transpose(weight, (2, 3, 1, 0)).reshape(KH * KW, IC, OC)
    w_mat = jnp.pad(w_mat, ((0, 0), (0, C_pad - IC), (0, OC_store - OC)))
    w_mat = w_mat.reshape(K_flat, OC_store).astype(compute_dtype)
    b_row = jnp.pad(bias.reshape(1, OC).astype(jnp.float32),
                    ((0, 0), (0, OC_store - OC)))

    def kernel(x_ref, w_ref, b_ref, o_ref):
        # x_ref: (H_work, W_work, C_pad)   compute dtype
        # w_ref: (K_flat, OC_store)        compute dtype
        # b_ref: (1, OC_store)             f32
        # o_ref: (T_OH, OW_p, OC_store)    f32
        row0 = pl.program_id(1) * (T_OH * stride)
        if (T_OH * stride) % 8 == 0:
            row0 = pl.multiple_of(row0, 8)
        strip = x_ref[pl.ds(row0, STRIP_H)]                 # (STRIP_H, W_work, C_pad)

        taps = []
        for kh in range(KH):
            for kw in range(KW):
                if stride == 1:
                    t = strip[kh:kh + T_OH, kw:kw + OW_p, :]
                else:
                    # TODO(synk): for stride>1 replace the strided sublane slice
                    # with a stride-phase reshape (or wrapper-side space-to-batch).
                    t = strip[kh:kh + (T_OH - 1) * stride + 1:stride,
                              kw:kw + (OW_p - 1) * stride + 1:stride, :]
                taps.append(t.reshape(M, C_pad))
        slab = jnp.concatenate(taps, axis=-1)               # (M, K_flat) im2col slab

        acc = jnp.dot(slab, w_ref[...],
                      preferred_element_type=jnp.float32)   # one big MXU matmul
        out = acc + b_ref[...]                              # single broadcast bias add
        o_ref[...] = out.reshape(T_OH, OW_p, OC_store).astype(o_ref.dtype)

    out = pl.pallas_call(
        kernel,
        out_shape=jax.ShapeDtypeStruct((B, OH_pad, OW_p, OC_store), jnp.float32),
        grid=(B, nrb),
        in_specs=[
            pl.BlockSpec((None, H_work, W_work, C_pad), lambda b, j: (b, 0, 0, 0)),
            pl.BlockSpec((K_flat, OC_store), lambda b, j: (0, 0)),
            pl.BlockSpec((1, OC_store), lambda b, j: (0, 0)),
        ],
        out_specs=pl.BlockSpec((None, T_OH, OW_p, OC_store), lambda b, j: (b, j, 0, 0)),
        compiler_params=pltpu.CompilerParams(
            dimension_semantics=("parallel", "parallel"),
            vmem_limit_bytes=vmem_limit),
    )(x_nhwc, w_mat, b_row)

    # Drop OH/OW/OC padding; return NCHW to match F.conv2d.
    out = out[:, :OH, :OW, :OC]
    return jnp.transpose(out, (0, 3, 1, 2))


# -----------------------------------------------------------------------------
# GalConv2d module (Fourier eigenbasis: deg=5, n_eig=2)
# -----------------------------------------------------------------------------
class GalConv2dPallas:
    def __init__(self, in_channels, out_channels, kernel_size=3, stride=1,
                 padding=0, deg=5, key=None, compute_dtype=jnp.bfloat16):
        self.ic, self.oc, self.ks = in_channels, out_channels, kernel_size
        self.stride, self.pad = stride, padding
        self.deg, self.n_eig = deg, 2
        self.compute_dtype = compute_dtype
        n = out_channels * in_channels * kernel_size ** 2 + out_channels
        # torch's reset_parameters zeros coeffs (trivial output); use small
        # deterministic random coeffs so the kernel exercises a non-trivial path.
        key = jax.random.PRNGKey(0) if key is None else key
        self.coeffs = 0.1 * jax.random.normal(key, (n, deg, 2), jnp.float32)
        self.dilation = jnp.ones((1,), jnp.float32)   # init of nn.Parameter(ones(1))
        self.shift = jnp.zeros((1,), jnp.float32)     # init of nn.Parameter(zeros(1))

    def __call__(self, x):
        # x: (B, ic+1, H, W); last channel (of the last batch element) carries s.
        s = x[-1, -1, 0, 0]
        xin = x[:, :-1]
        theta = s * self.dilation[0] + self.shift[0]
        w_flat = galerkin_fourier_weights(theta, self.coeffs)        # (n + oc,)
        n = self.oc * self.ic * self.ks * self.ks
        weight = w_flat[:n].reshape(self.oc, self.ic, self.ks, self.ks)
        bias = w_flat[n:].reshape(self.oc)
        return gal_conv2d_pallas(xin, weight, bias, self.stride, self.pad,
                                 compute_dtype=self.compute_dtype)


# -----------------------------------------------------------------------------
# Pure-JAX reference for correctness checking
# -----------------------------------------------------------------------------
def _ref_forward(layer, x):
    s = x[-1, -1, 0, 0]
    xin = x[:, :-1]
    theta = s * layer.dilation[0] + layer.shift[0]
    deg = layer.deg
    n_range = jnp.linspace(0.0, float(deg), deg, dtype=jnp.float32)
    w_flat = jnp.sum(layer.coeffs[:, :, 0] * jnp.cos(theta * n_range)
                     + layer.coeffs[:, :, 1] * jnp.sin(theta * n_range), axis=1)
    n = layer.oc * layer.ic * layer.ks ** 2
    weight = w_flat[:n].reshape(layer.oc, layer.ic, layer.ks, layer.ks)
    bias = w_flat[n:]
    out = lax.conv_general_dilated(
        xin, weight, (layer.stride, layer.stride),
        [(layer.pad, layer.pad), (layer.pad, layer.pad)],
        dimension_numbers=("NCHW", "OIHW", "NCHW"))
    return out + bias[None, :, None, None]


if __name__ == "__main__":
    key = jax.random.PRNGKey(0)
    k_x, k_c = jax.random.split(key)

    in_channels, out_channels, kernel_size = 4, 4, 3
    B, H, W = 2, 16, 16
    # Input has in_channels + 1 channels: the extra channel carries s.
    x = jax.random.normal(k_x, (B, in_channels + 1, H, W), jnp.float32)

    OH = OW = H - kernel_size + 1

    # f32 compute path: tight structural/indexing check against lax.conv.
    layer_f32 = GalConv2dPallas(in_channels, out_channels, kernel_size,
                                stride=1, padding=0, key=k_c,
                                compute_dtype=jnp.float32)
    out_f32 = jax.block_until_ready(jax.jit(lambda inp: layer_f32(inp))(x))
    ref = _ref_forward(layer_f32, x)
    assert out_f32.shape == (B, out_channels, OH, OW), out_f32.shape
    err_f32 = float(jnp.max(jnp.abs(out_f32 - ref)))
    assert jnp.allclose(out_f32, ref, atol=1e-3, rtol=1e-3), f"f32 max abs err {err_f32}"

    # bf16 MXU path (default): looser tolerance for bf16 operand rounding.
    layer_bf16 = GalConv2dPallas(in_channels, out_channels, kernel_size,
                                 stride=1, padding=0, key=k_c,
                                 compute_dtype=jnp.bfloat16)
    out_bf16 = jax.block_until_ready(jax.jit(lambda inp: layer_bf16(inp))(x))
    assert out_bf16.shape == (B, out_channels, OH, OW), out_bf16.shape
    err_bf16 = float(jnp.max(jnp.abs(out_bf16 - ref)))
    assert jnp.allclose(out_bf16, ref, atol=5e-2, rtol=5e-2), f"bf16 max abs err {err_bf16}"

    print("KERNEL_OK")
</pallas_src>

<mosaic_0001>
module attributes {stable_mosaic.version = 11 : i64} {
  func.func @kernel(%arg0: i32, %arg1: i32, %arg2: memref<1x16x18x8xf32, #tpu.memory_space<vmem>>, %arg3: memref<72x4xf32, #tpu.memory_space<vmem>>, %arg4: memref<1x4xf32, #tpu.memory_space<vmem>>, %arg5: memref<1x14x16x4xf32, #tpu.memory_space<vmem>>) attributes {dimension_semantics = [#tpu.dimension_semantics<parallel>, #tpu.dimension_semantics<parallel>], iteration_bounds = array<i64: 2, 1>, scalar_prefetch = 0 : i64, scratch_operands = 0 : i64, tpu.core_type = #tpu.core_type<tc>, window_params = [{transform_indices = @transform_0, window_bounds = array<i64: 1, 16, 18, 8>}, {pipeline_mode = #tpu.pipeline_mode<synchronous>, transform_indices = @transform_1, window_bounds = array<i64: 72, 4>}, {pipeline_mode = #tpu.pipeline_mode<synchronous>, transform_indices = @transform_2, window_bounds = array<i64: 1, 4>}, {transform_indices = @transform_3, window_bounds = array<i64: 1, 14, 16, 4>}]} {
    %c14_i32 = arith.constant 14 : i32
    %0 = arith.muli %arg1, %c14_i32 : i32
    %c0 = arith.constant 0 : index
    %1 = arith.index_cast %0 : i32 to index
    %c0_0 = arith.constant 0 : index
    %c0_1 = arith.constant 0 : index
    %2 = vector.load %arg2[%c0, %1, %c0_0, %c0_1] : memref<1x16x18x8xf32, #tpu.memory_space<vmem>>, vector<1x16x18x8xf32>
    %3 = vector.shape_cast %2 : vector<1x16x18x8xf32> to vector<16x18x8xf32>
    %4 = vector.extract_strided_slice %3 {offsets = [0, 0, 0], sizes = [14, 16, 8], strides = [1, 1, 1]} : vector<16x18x8xf32> to vector<14x16x8xf32>
    %5 = vector.shape_cast %4 : vector<14x16x8xf32> to vector<224x8xf32>
    %6 = vector.extract_strided_slice %3 {offsets = [0, 1, 0], sizes = [14, 16, 8], strides = [1, 1, 1]} : vector<16x18x8xf32> to vector<14x16x8xf32>
    %7 = vector.shape_cast %6 : vector<14x16x8xf32> to vector<224x8xf32>
    %8 = vector.extract_strided_slice %3 {offsets = [0, 2, 0], sizes = [14, 16, 8], strides = [1, 1, 1]} : vector<16x18x8xf32> to vector<14x16x8xf32>
    %9 = vector.shape_cast %8 : vector<14x16x8xf32> to vector<224x8xf32>
    %10 = vector.extract_strided_slice %3 {offsets = [1, 0, 0], sizes = [14, 16, 8], strides = [1, 1, 1]} : vector<16x18x8xf32> to vector<14x16x8xf32>
    %11 = vector.shape_cast %10 : vector<14x16x8xf32> to vector<224x8xf32>
    %12 = vector.extract_strided_slice %3 {offsets = [1, 1, 0], sizes = [14, 16, 8], strides = [1, 1, 1]} : vector<16x18x8xf32> to vector<14x16x8xf32>
    %13 = vector.shape_cast %12 : vector<14x16x8xf32> to vector<224x8xf32>
    %14 = vector.extract_strided_slice %3 {offsets = [1, 2, 0], sizes = [14, 16, 8], strides = [1, 1, 1]} : vector<16x18x8xf32> to vector<14x16x8xf32>
    %15 = vector.shape_cast %14 : vector<14x16x8xf32> to vector<224x8xf32>
    %16 = vector.extract_strided_slice %3 {offsets = [2, 0, 0], sizes = [14, 16, 8], strides = [1, 1, 1]} : vector<16x18x8xf32> to vector<14x16x8xf32>
    %17 = vector.shape_cast %16 : vector<14x16x8xf32> to vector<224x8xf32>
    %18 = vector.extract_strided_slice %3 {offsets = [2, 1, 0], sizes = [14, 16, 8], strides = [1, 1, 1]} : vector<16x18x8xf32> to vector<14x16x8xf32>
    %19 = vector.shape_cast %18 : vector<14x16x8xf32> to vector<224x8xf32>
    %20 = vector.extract_strided_slice %3 {offsets = [2, 2, 0], sizes = [14, 16, 8], strides = [1, 1, 1]} : vector<16x18x8xf32> to vector<14x16x8xf32>
    %21 = vector.shape_cast %20 : vector<14x16x8xf32> to vector<224x8xf32>
    %22 = tpu.concatenate %5, %7, %9, %11, %13, %15, %17, %19, %21 in 1 : vector<224x8xf32>, vector<224x8xf32>, vector<224x8xf32>, vector<224x8xf32>, vector<224x8xf32>, vector<224x8xf32>, vector<224x8xf32>, vector<224x8xf32>, vector<224x8xf32> -> vector<224x72xf32>
    %c0_2 = arith.constant 0 : index
    %c0_3 = arith.constant 0 : index
    %23 = vector.load %arg3[%c0_2, %c0_3] : memref<72x4xf32, #tpu.memory_space<vmem>>, vector<72x4xf32>
    %cst = arith.constant dense<0.000000e+00> : vector<224x4xf32>
    %24 = tpu.matmul %22, %23, %cst {dimension_numbers = #tpu.dot_dimension_numbers<[1], [0], [0], [1], [0, 0, 1, 1], [], []>} : vector<224x72xf32>, vector<72x4xf32>, vector<224x4xf32> -> vector<224x4xf32>
    %c0_4 = arith.constant 0 : index
    %c0_5 = arith.constant 0 : index
    %25 = vector.load %arg4[%c0_4, %c0_5] : memref<1x4xf32, #tpu.memory_space<vmem>>, vector<1x4xf32>
    %26 = vector.broadcast %25 : vector<1x4xf32> to vector<224x4xf32>
    %27 = arith.addf %24, %26 : vector<224x4xf32>
    %28 = vector.shape_cast %27 : vector<224x4xf32> to vector<14x16x4xf32>
    %c0_6 = arith.constant 0 : index
    %c0_7 = arith.constant 0 : index
    %c0_8 = arith.constant 0 : index
    %c0_9 = arith.constant 0 : index
    %29 = vector.load %arg5[%c0_6, %c0_7, %c0_8, %c0_9] : memref<1x14x16x4xf32, #tpu.memory_space<vmem>>, vector<1x14x16x4xf32>
    %30 = vector.shape_cast %29 : vector<1x14x16x4xf32> to vector<14x16x4xf32>
    %31 = vector.shape_cast %28 : vector<14x16x4xf32> to vector<1x14x16x4xf32>
    tpu.vector_store %arg5[%c0_6, %c0_7, %c0_8, %c0_9], %31 {strides = array<i32>} : memref<1x14x16x4xf32, #tpu.memory_space<vmem>>, vector<1x14x16x4xf32>,
    return
  }
  func.func @transform_0(%arg0: i32, %arg1: i32) -> (i32, i32, i32, i32) {
    %c0_i32 = arith.constant 0 : i32
    %c0_i32_0 = arith.constant 0 : i32
    %c0_i32_1 = arith.constant 0 : i32
    %c0_i32_2 = arith.constant 0 : i32
    return %arg0, %c0_i32, %c0_i32_0, %c0_i32_1 : i32, i32, i32, i32
  }
  func.func @transform_1(%arg0: i32, %arg1: i32) -> (i32, i32) {
    %c0_i32 = arith.constant 0 : i32
    %c0_i32_0 = arith.constant 0 : i32
    %c0_i32_1 = arith.constant 0 : i32
    return %c0_i32, %c0_i32_0 : i32, i32
  }
  func.func @transform_2(%arg0: i32, %arg1: i32) -> (i32, i32) {
    %c0_i32 = arith.constant 0 : i32
    %c0_i32_0 = arith.constant 0 : i32
    %c0_i32_1 = arith.constant 0 : i32
    return %c0_i32, %c0_i32_0 : i32, i32
  }
  func.func @transform_3(%arg0: i32, %arg1: i32) -> (i32, i32, i32, i32) {
    %c0_i32 = arith.constant 0 : i32
    %c0_i32_0 = arith.constant 0 : i32
    %c0_i32_1 = arith.constant 0 : i32
    return %arg0, %arg1, %c0_i32, %c0_i32_0 : i32, i32, i32, i32
  }
}

</mosaic_0001>

<llo_original>
// kernel: _lambda_.1
$region0: #{_lambda_.1}
  #allocation0 [shape = 'u32[]', space=smem, size = 0x4, offset = 0x4, fixed_abs, tag = 'smem constant byte address 0x4 - core index']
  #allocation1 [shape = 'u32[72,128]{1,0:T(1,128)}', space=vmem, size = 0x9000, scoped, tag = 'internal scratch']
  %s0 = inlined_call_operand.vmem [shape: f32[2,16,18,8], index: 0, kind: input, shape index: {}]
  %s1 = inlined_call_operand.vmem [shape: f32[72,4], index: 1, kind: input, shape index: {}]
  %s2 = inlined_call_operand.vmem [shape: f32[1,4], index: 2, kind: input, shape index: {}]
  %s3 = inlined_call_operand.vmem [shape: f32[2,14,16,4], index: 3, kind: output, shape index: {}]
  %s4 = sld [smem:[#allocation0]]
  $region45: #{_lambda_.1} parent=0
    _
  %s6 = ssub.s32 1, %s4
  %s7 = scalar_select 0, %s6, %s4
  loop: start=0, step=1, limit=4
  $region2: #{_lambda_.1} parent=0 // loop_pre_header
    _
  $region3: #{_lambda_.1} parent=0 // loop_header
    %s9 = sphi 0, %s13
    %p10 = scmp.ge.s32.totalorder %s9, 4
    %s16 = sphi 0, %s28
    %s17 = sphi 0, %s24
    %s18 = sphi 0, %s16
    %s19 = sphi 0, %s17
    %s20 = sphi 0, %s18
    %s21 = sphi 0, %s19
    %s31 = sphi 0, %s33
    %s34 = sphi 0, %s31
    %s35 = sphi 0, %s34
    %s51 = sphi 0, %s35
    %s55 = sphi 0, %s55
    %s57 = sphi 0, %s55
    %s58 = sphi 0, %s57
    %s72 = sphi 0, %s58
    %s76 = sphi 0, %s76
    %s78 = sphi 0, %s76
    %s79 = sphi 0, %s78
    %s93 = sphi 0, %s79
    %s101 = sphi 0, %s103
    %s104 = sphi 0, %s101
    %s105 = sphi 0, %s104
    %s121 = sphi 0, %s105
  $region4: #{_lambda_.1} parent=0 // loop_header_branch
    %12 = sbr.rel (%p10) target = $region8
  $region5: #{_lambda_.1} parent=0 // loop_body
    %s14 = ssub.s32 %s9, 1
    %s15 = ssub.s32 %s9, 2
    %s22 = sadd.s32 1, %s17
    %p23 = scmp.ge.s32.totalorder %s22, 1
    %s24 = scalar_select %p23, 0, %s22
    %s25 = sadd.s32 1, %s16
    %s26 = scalar_select %p23, %s25, %s16
    %p27 = scmp.ge.s32.totalorder %s26, 2
    %s28 = scalar_select %p27, 0, %s26
    %s29 = ssub.s32 %s16, %s28
    %p30 = scmp.eq.s32.totalorder %s29, 0
    %s32 = sadd.s32 %s31, 1
    %s33 = scalar_select %p30, %s31, %s32
    %p36 = pneg %p30
    %p37 = scmp.eq.s32.totalorder %s9, 1
    %p38 = por %p36, %p37
    %p39 = scmp.ne.s32.totalorder %s31, %s34
    %p40 = scmp.eq.s32.totalorder %s9, 0
    %p41 = por %p39, %p40
    %p42 = scmp.ne.s32.totalorder %s31, %s34
    %p43 = scmp.eq.s32.totalorder %s14, 1
    %p44 = por %p42, %p43
    %p45 = scmp.ne.s32.totalorder %s34, %s35
    %p46 = scmp.eq.s32.totalorder %s14, 0
    %p47 = por %p45, %p46
    %p48 = scmp.ne.s32.totalorder %s34, %s35
    %p49 = scmp.eq.s32.totalorder %s15, 1
    %p50 = por %p48, %p49
    %p52 = scmp.ne.s32.totalorder %s35, %s51
    %p53 = scmp.eq.s32.totalorder %s15, 0
    %p54 = por %p52, %p53
    %s56 = sadd.s32 %s55, 1
    %p59 = scmp.eq.s32.totalorder %s9, 1
    %p60 = scmp.ne.s32.totalorder %s55, %s57
    %p61 = scmp.eq.s32.totalorder %s9, 0
    %p62 = por %p60, %p61
    %p63 = scmp.ne.s32.totalorder %s55, %s57
    %p64 = scmp.eq.s32.totalorder %s14, 1
    %p65 = por %p63, %p64
    %p66 = scmp.ne.s32.totalorder %s57, %s58
    %p67 = scmp.eq.s32.totalorder %s14, 0
    %p68 = por %p66, %p67
    %p69 = scmp.ne.s32.totalorder %s57, %s58
    %p70 = scmp.eq.s32.totalorder %s15, 1
    %p71 = por %p69, %p70
    %p73 = scmp.ne.s32.totalorder %s58, %s72
    %p74 = scmp.eq.s32.totalorder %s15, 0
    %p75 = por %p73, %p74
    %s77 = sadd.s32 %s76, 1
    %p80 = scmp.eq.s32.totalorder %s9, 1
    %p81 = scmp.ne.s32.totalorder %s76, %s78
    %p82 = scmp.eq.s32.totalorder %s9, 0
    %p83 = por %p81, %p82
    %p84 = scmp.ne.s32.totalorder %s76, %s78
    %p85 = scmp.eq.s32.totalorder %s14, 1
    %p86 = por %p84, %p85
    %p87 = scmp.ne.s32.totalorder %s78, %s79
    %p88 = scmp.eq.s32.totalorder %s14, 0
    %p89 = por %p87, %p88
    %p90 = scmp.ne.s32.totalorder %s78, %s79
    %p91 = scmp.eq.s32.totalorder %s15, 1
    %p92 = por %p90, %p91
    %p94 = scmp.ne.s32.totalorder %s79, %s93
    %p95 = scmp.eq.s32.totalorder %s15, 0
    %p96 = por %p94, %p95
    %s97 = ssub.s32 %s16, %s28
    %s98 = ssub.s32 %s17, %s24
    %s99 = sor.u32 %s97, %s98
    %p100 = scmp.eq.s32.totalorder %s99, 0
    %s102 = sadd.s32 %s101, 1
    %s103 = scalar_select %p100, %s101, %s102
    %p106 = pneg %p100
    %p107 = scmp.eq.s32.totalorder %s9, 1
    %p108 = por %p106, %p107
    %p109 = scmp.ne.s32.totalorder %s101, %s104
    %p110 = scmp.eq.s32.totalorder %s9, 0
    %p111 = por %p109, %p110
    %p112 = scmp.ne.s32.totalorder %s101, %s104
    %p113 = scmp.eq.s32.totalorder %s14, 1
    %p114 = por %p112, %p113
    %p115 = scmp.ne.s32.totalorder %s104, %s105
    %p116 = scmp.eq.s32.totalorder %s14, 0
    %p117 = por %p115, %p116
    %p118 = scmp.ne.s32.totalorder %s104, %s105
    %p119 = scmp.eq.s32.totalorder %s15, 1
    %p120 = por %p118, %p119
    %p122 = scmp.ne.s32.totalorder %s105, %s121
    %p123 = scmp.eq.s32.totalorder %s15, 0
    %p124 = por %p122, %p123
    %p125 = scmp.le.s32.totalorder 1, %s9
    %p126 = scmp.lt.s32.totalorder %s9, 3
    %p127 = pnand %p125, %p126
    %p128 = pneg %p127
    // Predicated region
    $region9: #{_lambda_.1} parent=5 // pred_check
      _
    $region10: #{_lambda_.1} parent=5 // pred_check_branch
      %130 = sbr.rel (%p127) target = $region12
    $region11: #{_lambda_.1} parent=5 // pred_region
      %s131 = ssub.s32 %s9, 1
      // Predicated region
      $region13: #{_lambda_.1} parent=11 // pred_check
        %p132 = pneg %p68
      $region14: #{_lambda_.1} parent=11 // pred_check_branch
        %134 = sbr.rel (%p132) target = $region16
      $region15: #{_lambda_.1} parent=11 // pred_region
        _
      $region16: #{_lambda_.1} parent=11 // pred_fallthru
        _
      // Predicated region
      $region17: #{_lambda_.1} parent=11 // pred_check
        %p135 = pneg %p89
      $region18: #{_lambda_.1} parent=11 // pred_check_branch
        %137 = sbr.rel (%p135) target = $region20
      $region19: #{_lambda_.1} parent=11 // pred_region
        _
      $region20: #{_lambda_.1} parent=11 // pred_fallthru
        _
    $region12: #{_lambda_.1} parent=5 // pred_fallthru
      _
    %p138 = scmp.lt.s32.totalorder %s9, 2
    // Predicated region
    $region21: #{_lambda_.1} parent=5 // pred_check
      %p139 = pneg %p138
    $region22: #{_lambda_.1} parent=5 // pred_check_branch
      %141 = sbr.rel (%p139) target = $region24
    $region23: #{_lambda_.1} parent=5 // pred_region
      // Predicated region
      $region25: #{_lambda_.1} parent=23 // pred_check
        %p142 = pneg %p41
      $region26: #{_lambda_.1} parent=23 // pred_check_branch
        %144 = sbr.rel (%p142) target = $region28
      $region27: #{_lambda_.1} parent=23 // pred_region
        %p145 = scmp.lt.s32.totalorder %s16, 1
        %s146 = scalar_select %p145, %s16, 1
        %s147 = smul.addr %s146, 48
        %s148 = smul.addr %s147, 8
        %s149 = scalar_lea.vmem %s0, %s148
      $region28: #{_lambda_.1} parent=23 // pred_fallthru
        _
    $region24: #{_lambda_.1} parent=5 // pred_fallthru
      _
    %p150 = scmp.le.s32.totalorder 1, %s9
    %p151 = scmp.lt.s32.totalorder %s9, 3
    %p152 = pnand %p150, %p151
    %p153 = pneg %p152
    // Predicated region
    $region29: #{_lambda_.1} parent=5 // pred_check
      _
    $region30: #{_lambda_.1} parent=5 // pred_check_branch
      %155 = sbr.rel (%p152) target = $region32
    $region31: #{_lambda_.1} parent=5 // pred_region
      %s156 = ssub.s32 %s9, 1
      %p157 = scmp.lt.s32.totalorder %s18, 1
      %s158 = scalar_select %p157, %s18, 1
      %s159 = smul.addr %s158, 48
      %s160 = smul.addr %s159, 8
      %s161 = scalar_lea.vmem %s0, %s160
      %p162 = pneg %p47
      %p163 = pneg %p44
      %p164 = pneg %p68
      %p165 = pneg %p65
      %p166 = pneg %p89
      %p167 = pneg %p86
      %p168 = pneg %p117
      %p169 = pneg %p114
      %s170 = smul.u32 14, %s19
      %p171 = scmp.lt.s32.totalorder %s18, 1
      %s172 = scalar_select %p171, %s18, 1
      %p173 = scmp.lt.s32.totalorder %s170, 13
      %s174 = scalar_select %p173, %s170, 13
      %s175 = smul.addr %s174, 2
      %s176 = smul.addr %s172, 28
      %s177 = sadd.s32 %s175, %s176
      %s178 = smul.addr %s177, 8
      %s179 = scalar_lea.vmem %s3, %s178
      %p180 = scmp.lt.s32.totalorder %s18, 1
      %s181 = scalar_select %p180, %s18, 1
      %s182 = smul.addr %s181, 48
      %s183 = smul.addr %s182, 8
      %s184 = scalar_lea.vmem %s0, %s183
      %s185 = smul.u32 14, %s19
      %p186 = scmp.lt.s32.totalorder %s18, 1
      %s187 = scalar_select %p186, %s18, 1
      %p188 = scmp.lt.s32.totalorder %s185, 13
      %s189 = scalar_select %p188, %s185, 13
      %s190 = smul.addr %s189, 2
      %s191 = smul.addr %s187, 28
      %s192 = sadd.s32 %s190, %s191
      %s193 = smul.addr %s192, 8
      %s194 = scalar_lea.vmem %s3, %s193
      %s195 = smul.u32 14, %s19
      %s196 = smul.u32 %s19, 14
      %s197 = smul.u32 %s196, 24
      %s198 = scalar_lea.vmem %s184, %s197
      %v199 = vld [vmem:[%s198] sm:$0xff]
      %v200 = vld [vmem:[%s198 + $0x8] sm:$0xff]
      %v201 = vld [vmem:[%s198 + $0x10] sm:$0x3]
      %v202 = vld [vmem:[%s198 + $0x18] sm:$0xff]
      %v203 = vld [vmem:[%s198 + $0x20] sm:$0xff]
      %v204 = vld [vmem:[%s198 + $0x28] sm:$0x3]
      %v205 = vld [vmem:[%s198 + $0x30] sm:$0xff]
      %v206 = vld [vmem:[%s198 + $0x38] sm:$0xff]
      %v207 = vld [vmem:[%s198 + $0x40] sm:$0x3]
      %v208 = vld [vmem:[%s198 + $0x48] sm:$0xff]
      %v209 = vld [vmem:[%s198 + $0x50] sm:$0xff]
      %v210 = vld [vmem:[%s198 + $0x58] sm:$0x3]
      %v211 = vld [vmem:[%s198 + $0x60] sm:$0xff]
      %v212 = vld [vmem:[%s198 + $0x68] sm:$0xff]
      %v213 = vld [vmem:[%s198 + $0x70] sm:$0x3]
      %v214 = vld [vmem:[%s198 + $0x78] sm:$0xff]
      %v215 = vld [vmem:[%s198 + $0x80] sm:$0xff]
      %v216 = vld [vmem:[%s198 + $0x88] sm:$0x3]
      %v217 = vld [vmem:[%s198 + $0x90] sm:$0xff]
      %v218 = vld [vmem:[%s198 + $0x98] sm:$0xff]
      %v219 = vld [vmem:[%s198 + $0xa0] sm:$0x3]
      %v220 = vld [vmem:[%s198 + $0xa8] sm:$0xff]
      %v221 = vld [vmem:[%s198 + $0xb0] sm:$0xff]
      %v222 = vld [vmem:[%s198 + $0xb8] sm:$0x3]
      %v223 = vld [vmem:[%s198 + $0xc0] sm:$0xff]
      %v224 = vld [vmem:[%s198 + $0xc8] sm:$0xff]
      %v225 = vld [vmem:[%s198 + $0xd0] sm:$0x3]
      %v226 = vld [vmem:[%s198 + $0xd8] sm:$0xff]
      %v227 = vld [vmem:[%s198 + $0xe0] sm:$0xff]
      %v228 = vld [vmem:[%s198 + $0xe8] sm:$0x3]
      %v229 = vld [vmem:[%s198 + $0xf0] sm:$0xff]
      %v230 = vld [vmem:[%s198 + $0xf8] sm:$0xff]
      %v231 = vld [vmem:[%s198 + $0x100] sm:$0x3]
      %v232 = vld [vmem:[%s198 + $0x108] sm:$0xff]
      %v233 = vld [vmem:[%s198 + $0x110] sm:$0xff]
      %v234 = vld [vmem:[%s198 + $0x118] sm:$0x3]
      %v235 = vld [vmem:[%s198 + $0x120] sm:$0xff]
      %v236 = vld [vmem:[%s198 + $0x128] sm:$0xff]
      %v237 = vld [vmem:[%s198 + $0x130] sm:$0x3]
      %v238 = vld [vmem:[%s198 + $0x138] sm:$0xff]
      %v239 = vld [vmem:[%s198 + $0x140] sm:$0xff]
      %v240 = vld [vmem:[%s198 + $0x148] sm:$0x3]
      %v241 = vld [vmem:[%s198 + $0x150] sm:$0xff]
      %v242 = vld [vmem:[%s198 + $0x158] sm:$0xff]
      %v243 = vld [vmem:[%s198 + $0x160] sm:$0x3]
      %v244 = vld [vmem:[%s198 + $0x168] sm:$0xff]
      %v245 = vld [vmem:[%s198 + $0x170] sm:$0xff]
      %v246 = vld [vmem:[%s198 + $0x178] sm:$0x3]
      %vm289 = vcmask 1046528
      %v290 = vrot.slane %v199, 1
      %v291 = vrot.slane %v200, 1
      %v292 = vsel %vm289, %v290, %v291
      %v293 = vrot.slane %v201, 1
      %v294 = vsel %vm289, %v291, %v293
      %v295 = vrot.slane %v202, 1
      %v296 = vrot.slane %v203, 1
      %v297 = vsel %vm289, %v295, %v296
      %v298 = vrot.slane %v204, 1
      %v299 = vsel %vm289, %v296, %v298
      %v300 = vrot.slane %v205, 1
      %v301 = vrot.slane %v206, 1
      %v302 = vsel %vm289, %v300, %v301
      %v303 = vrot.slane %v207, 1
      %v304 = vsel %vm289, %v301, %v303
      %v305 = vrot.slane %v208, 1
      %v306 = vrot.slane %v209, 1
      %v307 = vsel %vm289, %v305, %v306
      %v308 = vrot.slane %v210, 1
      %v309 = vsel %vm289, %v306, %v308
      %v310 = vrot.slane %v211, 1
      %v311 = vrot.slane %v212, 1
      %v312 = vsel %vm289, %v310, %v311
      %v313 = vrot.slane %v213, 1
      %v314 = vsel %vm289, %v311, %v313
      %v315 = vrot.slane %v214, 1
      %v316 = vrot.slane %v215, 1
      %v317 = vsel %vm289, %v315, %v316
      %v318 = vrot.slane %v216, 1
      %v319 = vsel %vm289, %v316, %v318
      %v320 = vrot.slane %v217, 1
      %v321 = vrot.slane %v218, 1
      %v322 = vsel %vm289, %v320, %v321
      %v323 = vrot.slane %v219, 1
      %v324 = vsel %vm289, %v321, %v323
      %v325 = vrot.slane %v220, 1
      %v326 = vrot.slane %v221, 1
      %v327 = vsel %vm289, %v325, %v326
      %v328 = vrot.slane %v222, 1
      %v329 = vsel %vm289, %v326, %v328
      %v330 = vrot.slane %v223, 1
      %v331 = vrot.slane %v224, 1
      %v332 = vsel %vm289, %v330, %v331
      %v333 = vrot.slane %v225, 1
      %v334 = vsel %vm289, %v331, %v333
      %v335 = vrot.slane %v226, 1
      %v336 = vrot.slane %v227, 1
      %v337 = vsel %vm289, %v335, %v336
      %v338 = vrot.slane %v228, 1
      %v339 = vsel %vm289, %v336, %v338
      %v340 = vrot.slane %v229, 1
      %v341 = vrot.slane %v230, 1
      %v342 = vsel %vm289, %v340, %v341
      %v343 = vrot.slane %v231, 1
      %v344 = vsel %vm289, %v341, %v343
      %v345 = vrot.slane %v232, 1
      %v346 = vrot.slane %v233, 1
      %v347 = vsel %vm289, %v345, %v346
      %v348 = vrot.slane %v234, 1
      %v349 = vsel %vm289, %v346, %v348
      %v350 = vrot.slane %v235, 1
      %v351 = vrot.slane %v236, 1
      %v352 = vsel %vm289, %v350, %v351
      %v353 = vrot.slane %v237, 1
      %v354 = vsel %vm289, %v351, %v353
      %v355 = vrot.slane %v238, 1
      %v356 = vrot.slane %v239, 1
      %v357 = vsel %vm289, %v355, %v356
      %v358 = vrot.slane %v240, 1
      %v359 = vsel %vm289, %v356, %v358
      %vm360 = vcmask 1045504
      %v361 = vrot.slane %v199, 2
      %v362 = vrot.slane %v200, 2
      %v363 = vsel %vm360, %v361, %v362
      %v364 = vrot.slane %v201, 2
      %v365 = vsel %vm360, %v362, %v364
      %v366 = vrot.slane %v202, 2
      %v367 = vrot.slane %v203, 2
      %v368 = vsel %vm360, %v366, %v367
      %v369 = vrot.slane %v204, 2
      %v370 = vsel %vm360, %v367, %v369
      %v371 = vrot.slane %v205, 2
      %v372 = vrot.slane %v206, 2
      %v373 = vsel %vm360, %v371, %v372
      %v374 = vrot.slane %v207, 2
      %v375 = vsel %vm360, %v372, %v374
      %v376 = vrot.slane %v208, 2
      %v377 = vrot.slane %v209, 2
      %v378 = vsel %vm360, %v376, %v377
      %v379 = vrot.slane %v210, 2
      %v380 = vsel %vm360, %v377, %v379
      %v381 = vrot.slane %v211, 2
      %v382 = vrot.slane %v212, 2
      %v383 = vsel %vm360, %v381, %v382
      %v384 = vrot.slane %v213, 2
      %v385 = vsel %vm360, %v382, %v384
      %v386 = vrot.slane %v214, 2
      %v387 = vrot.slane %v215, 2
      %v388 = vsel %vm360, %v386, %v387
      %v389 = vrot.slane %v216, 2
      %v390 = vsel %vm360, %v387, %v389
      %v391 = vrot.slane %v217, 2
      %v392 = vrot.slane %v218, 2
      %v393 = vsel %vm360, %v391, %v392
      %v394 = vrot.slane %v219, 2
      %v395 = vsel %vm360, %v392, %v394
      %v396 = vrot.slane %v220, 2
      %v397 = vrot.slane %v221, 2
      %v398 = vsel %vm360, %v396, %v397
      %v399 = vrot.slane %v222, 2
      %v400 = vsel %vm360, %v397, %v399
      %v401 = vrot.slane %v223, 2
      %v402 = vrot.slane %v224, 2
      %v403 = vsel %vm360, %v401, %v402
      %v404 = vrot.slane %v225, 2
      %v405 = vsel %vm360, %v402, %v404
      %v406 = vrot.slane %v226, 2
      %v407 = vrot.slane %v227, 2
      %v408 = vsel %vm360, %v406, %v407
      %v409 = vrot.slane %v228, 2
      %v410 = vsel %vm360, %v407, %v409
      %v411 = vrot.slane %v229, 2
      %v412 = vrot.slane %v230, 2
      %v413 = vsel %vm360, %v411, %v412
      %v414 = vrot.slane %v231, 2
      %v415 = vsel %vm360, %v412, %v414
      %v416 = vrot.slane %v232, 2
      %v417 = vrot.slane %v233, 2
      %v418 = vsel %vm360, %v416, %v417
      %v419 = vrot.slane %v234, 2
      %v420 = vsel %vm360, %v417, %v419
      %v421 = vrot.slane %v235, 2
      %v422 = vrot.slane %v236, 2
      %v423 = vsel %vm360, %v421, %v422
      %v424 = vrot.slane %v237, 2
      %v425 = vsel %vm360, %v422, %v424
      %v426 = vrot.slane %v238, 2
      %v427 = vrot.slane %v239, 2
      %v428 = vsel %vm360, %v426, %v427
      %v429 = vrot.slane %v240, 2
      %v430 = vsel %vm360, %v427, %v429
      %v434 = vrot.slane %v241, 1
      %v435 = vrot.slane %v242, 1
      %v436 = vsel %vm289, %v434, %v435
      %v437 = vrot.slane %v243, 1
      %v438 = vsel %vm289, %v435, %v437
      %v439 = vrot.slane %v241, 2
      %v440 = vrot.slane %v242, 2
      %v441 = vsel %vm360, %v439, %v440
      %v442 = vrot.slane %v243, 2
      %v443 = vsel %vm360, %v440, %v442
      %v447 = vrot.slane %v244, 1
      %v448 = vrot.slane %v245, 1
      %v449 = vsel %vm289, %v447, %v448
      %v450 = vrot.slane %v246, 1
      %v451 = vsel %vm289, %v448, %v450
      %v452 = vrot.slane %v244, 2
      %v453 = vrot.slane %v245, 2
      %v454 = vsel %vm360, %v452, %v453
      %v455 = vrot.slane %v246, 2
      %v456 = vsel %vm360, %v453, %v455
      %457 = vrot.lane.b32.xlu0 %v292, 8
      %v458 = vpop.permute.xlu0 %457
      %459 = vrot.lane.b32.xlu0 %v294, 8
      %v460 = vpop.permute.xlu0 %459
      %461 = vrot.lane.b32.xlu0 %v297, 8
      %v462 = vpop.permute.xlu0 %461
      %463 = vrot.lane.b32.xlu0 %v299, 8
      %v464 = vpop.permute.xlu0 %463
      %465 = vrot.lane.b32.xlu0 %v302, 8
      %v466 = vpop.permute.xlu0 %465
      %467 = vrot.lane.b32.xlu0 %v304, 8
      %v468 = vpop.permute.xlu0 %467
      %469 = vrot.lane.b32.xlu0 %v307, 8
      %v470 = vpop.permute.xlu0 %469
      %471 = vrot.lane.b32.xlu0 %v309, 8
      %v472 = vpop.permute.xlu0 %471
      %473 = vrot.lane.b32.xlu0 %v312, 8
      %v474 = vpop.permute.xlu0 %473
      %475 = vrot.lane.b32.xlu0 %v314, 8
      %v476 = vpop.permute.xlu0 %475
      %477 = vrot.lane.b32.xlu0 %v317, 8
      %v478 = vpop.permute.xlu0 %477
      %479 = vrot.lane.b32.xlu0 %v319, 8
      %v480 = vpop.permute.xlu0 %479
      %481 = vrot.lane.b32.xlu0 %v322, 8
      %v482 = vpop.permute.xlu0 %481
      %483 = vrot.lane.b32.xlu0 %v324, 8
      %v484 = vpop.permute.xlu0 %483
      %485 = vrot.lane.b32.xlu0 %v327, 8
      %v486 = vpop.permute.xlu0 %485
      %487 = vrot.lane.b32.xlu0 %v329, 8
      %v488 = vpop.permute.xlu0 %487
      %489 = vrot.lane.b32.xlu0 %v332, 8
      %v490 = vpop.permute.xlu0 %489
      %491 = vrot.lane.b32.xlu0 %v334, 8
      %v492 = vpop.permute.xlu0 %491
      %493 = vrot.lane.b32.xlu0 %v337, 8
      %v494 = vpop.permute.xlu0 %493
      %495 = vrot.lane.b32.xlu0 %v339, 8
      %v496 = vpop.permute.xlu0 %495
      %497 = vrot.lane.b32.xlu0 %v342, 8
      %v498 = vpop.permute.xlu0 %497
      %499 = vrot.lane.b32.xlu0 %v344, 8
      %v500 = vpop.permute.xlu0 %499
      %501 = vrot.lane.b32.xlu0 %v347, 8
      %v502 = vpop.permute.xlu0 %501
      %503 = vrot.lane.b32.xlu0 %v349, 8
      %v504 = vpop.permute.xlu0 %503
      %505 = vrot.lane.b32.xlu0 %v352, 8
      %v506 = vpop.permute.xlu0 %505
      %507 = vrot.lane.b32.xlu0 %v354, 8
      %v508 = vpop.permute.xlu0 %507
      %509 = vrot.lane.b32.xlu0 %v357, 8
      %v510 = vpop.permute.xlu0 %509
      %511 = vrot.lane.b32.xlu0 %v359, 8
      %v512 = vpop.permute.xlu0 %511
      %541 = vrot.lane.b32.xlu0 %v363, 16
      %v542 = vpop.permute.xlu0 %541
      %543 = vrot.lane.b32.xlu0 %v365, 16
      %v544 = vpop.permute.xlu0 %543
      %545 = vrot.lane.b32.xlu0 %v368, 16
      %v546 = vpop.permute.xlu0 %545
      %547 = vrot.lane.b32.xlu0 %v370, 16
      %v548 = vpop.permute.xlu0 %547
      %549 = vrot.lane.b32.xlu0 %v373, 16
      %v550 = vpop.permute.xlu0 %549
      %551 = vrot.lane.b32.xlu0 %v375, 16
      %v552 = vpop.permute.xlu0 %551
      %553 = vrot.lane.b32.xlu0 %v378, 16
      %v554 = vpop.permute.xlu0 %553
      %555 = vrot.lane.b32.xlu0 %v380, 16
      %v556 = vpop.permute.xlu0 %555
      %557 = vrot.lane.b32.xlu0 %v383, 16
      %v558 = vpop.permute.xlu0 %557
      %559 = vrot.lane.b32.xlu0 %v385, 16
      %v560 = vpop.permute.xlu0 %559
      %561 = vrot.lane.b32.xlu0 %v388, 16
      %v562 = vpop.permute.xlu0 %561
      %563 = vrot.lane.b32.xlu0 %v390, 16
      %v564 = vpop.permute.xlu0 %563
      %565 = vrot.lane.b32.xlu0 %v393, 16
      %v566 = vpop.permute.xlu0 %565
      %567 = vrot.lane.b32.xlu0 %v395, 16
      %v568 = vpop.permute.xlu0 %567
      %569 = vrot.lane.b32.xlu0 %v398, 16
      %v570 = vpop.permute.xlu0 %569
      %571 = vrot.lane.b32.xlu0 %v400, 16
      %v572 = vpop.permute.xlu0 %571
      %573 = vrot.lane.b32.xlu0 %v403, 16
      %v574 = vpop.permute.xlu0 %573
      %575 = vrot.lane.b32.xlu0 %v405, 16
      %v576 = vpop.permute.xlu0 %575
      %577 = vrot.lane.b32.xlu0 %v408, 16
      %v578 = vpop.permute.xlu0 %577
      %579 = vrot.lane.b32.xlu0 %v410, 16
      %v580 = vpop.permute.xlu0 %579
      %581 = vrot.lane.b32.xlu0 %v413, 16
      %v582 = vpop.permute.xlu0 %581
      %583 = vrot.lane.b32.xlu0 %v415, 16
      %v584 = vpop.permute.xlu0 %583
      %585 = vrot.lane.b32.xlu0 %v418, 16
      %v586 = vpop.permute.xlu0 %585
      %587 = vrot.lane.b32.xlu0 %v420, 16
      %v588 = vpop.permute.xlu0 %587
      %589 = vrot.lane.b32.xlu0 %v423, 16
      %v590 = vpop.permute.xlu0 %589
      %591 = vrot.lane.b32.xlu0 %v425, 16
      %v592 = vpop.permute.xlu0 %591
      %593 = vrot.lane.b32.xlu0 %v428, 16
      %v594 = vpop.permute.xlu0 %593
      %595 = vrot.lane.b32.xlu0 %v430, 16
      %v596 = vpop.permute.xlu0 %595
      %625 = vrot.lane.b32.xlu0 %v202, 24
      %v626 = vpop.permute.xlu0 %625
      %627 = vrot.lane.b32.xlu0 %v203, 24
      %v628 = vpop.permute.xlu0 %627
      %629 = vrot.lane.b32.xlu0 %v205, 24
      %v630 = vpop.permute.xlu0 %629
      %631 = vrot.lane.b32.xlu0 %v206, 24
      %v632 = vpop.permute.xlu0 %631
      %633 = vrot.lane.b32.xlu0 %v208, 24
      %v634 = vpop.permute.xlu0 %633
      %635 = vrot.lane.b32.xlu0 %v209, 24
      %v636 = vpop.permute.xlu0 %635
      %637 = vrot.lane.b32.xlu0 %v211, 24
      %v638 = vpop.permute.xlu0 %637
      %639 = vrot.lane.b32.xlu0 %v212, 24
      %v640 = vpop.permute.xlu0 %639
      %641 = vrot.lane.b32.xlu0 %v214, 24
      %v642 = vpop.permute.xlu0 %641
      %643 = vrot.lane.b32.xlu0 %v215, 24
      %v644 = vpop.permute.xlu0 %643
      %645 = vrot.lane.b32.xlu0 %v217, 24
      %v646 = vpop.permute.xlu0 %645
      %647 = vrot.lane.b32.xlu0 %v218, 24
      %v648 = vpop.permute.xlu0 %647
      %649 = vrot.lane.b32.xlu0 %v220, 24
      %v650 = vpop.permute.xlu0 %649
      %651 = vrot.lane.b32.xlu0 %v221, 24
      %v652 = vpop.permute.xlu0 %651
      %653 = vrot.lane.b32.xlu0 %v223, 24
      %v654 = vpop.permute.xlu0 %653
      %655 = vrot.lane.b32.xlu0 %v224, 24
      %v656 = vpop.permute.xlu0 %655
      %657 = vrot.lane.b32.xlu0 %v226, 24
      %v658 = vpop.permute.xlu0 %657
      %659 = vrot.lane.b32.xlu0 %v227, 24
      %v660 = vpop.permute.xlu0 %659
      %661 = vrot.lane.b32.xlu0 %v229, 24
      %v662 = vpop.permute.xlu0 %661
      %663 = vrot.lane.b32.xlu0 %v230, 24
      %v664 = vpop.permute.xlu0 %663
      %665 = vrot.lane.b32.xlu0 %v232, 24
      %v666 = vpop.permute.xlu0 %665
      %667 = vrot.lane.b32.xlu0 %v233, 24
      %v668 = vpop.permute.xlu0 %667
      %669 = vrot.lane.b32.xlu0 %v235, 24
      %v670 = vpop.permute.xlu0 %669
      %671 = vrot.lane.b32.xlu0 %v236, 24
      %v672 = vpop.permute.xlu0 %671
      %673 = vrot.lane.b32.xlu0 %v238, 24
      %v674 = vpop.permute.xlu0 %673
      %675 = vrot.lane.b32.xlu0 %v239, 24
      %v676 = vpop.permute.xlu0 %675
      %677 = vrot.lane.b32.xlu0 %v241, 24
      %v678 = vpop.permute.xlu0 %677
      %679 = vrot.lane.b32.xlu0 %v242, 24
      %v680 = vpop.permute.xlu0 %679
      %709 = vrot.lane.b32.xlu0 %v297, 32
      %v710 = vpop.permute.xlu0 %709
      %711 = vrot.lane.b32.xlu0 %v299, 32
      %v712 = vpop.permute.xlu0 %711
      %713 = vrot.lane.b32.xlu0 %v302, 32
      %v714 = vpop.permute.xlu0 %713
      %715 = vrot.lane.b32.xlu0 %v304, 32
      %v716 = vpop.permute.xlu0 %715
      %717 = vrot.lane.b32.xlu0 %v307, 32
      %v718 = vpop.permute.xlu0 %717
      %719 = vrot.lane.b32.xlu0 %v309, 32
      %v720 = vpop.permute.xlu0 %719
      %721 = vrot.lane.b32.xlu0 %v312, 32
      %v722 = vpop.permute.xlu0 %721
      %723 = vrot.lane.b32.xlu0 %v314, 32
      %v724 = vpop.permute.xlu0 %723
      %725 = vrot.lane.b32.xlu0 %v317, 32
      %v726 = vpop.permute.xlu0 %725
      %727 = vrot.lane.b32.xlu0 %v319, 32
      %v728 = vpop.permute.xlu0 %727
      %729 = vrot.lane.b32.xlu0 %v322, 32
      %v730 = vpop.permute.xlu0 %729
      %731 = vrot.lane.b32.xlu0 %v324, 32
      %v732 = vpop.permute.xlu0 %731
      %733 = vrot.lane.b32.xlu0 %v327, 32
      %v734 = vpop.permute.xlu0 %733
      %735 = vrot.lane.b32.xlu0 %v329, 32
      %v736 = vpop.permute.xlu0 %735
      %737 = vrot.lane.b32.xlu0 %v332, 32
      %v738 = vpop.permute.xlu0 %737
      %739 = vrot.lane.b32.xlu0 %v334, 32
      %v740 = vpop.permute.xlu0 %739
      %741 = vrot.lane.b32.xlu0 %v337, 32
      %v742 = vpop.permute.xlu0 %741
      %743 = vrot.lane.b32.xlu0 %v339, 32
      %v744 = vpop.permute.xlu0 %743
      %745 = vrot.lane.b32.xlu0 %v342, 32
      %v746 = vpop.permute.xlu0 %745
      %747 = vrot.lane.b32.xlu0 %v344, 32
      %v748 = vpop.permute.xlu0 %747
      %749 = vrot.lane.b32.xlu0 %v347, 32
      %v750 = vpop.permute.xlu0 %749
      %751 = vrot.lane.b32.xlu0 %v349, 32
      %v752 = vpop.permute.xlu0 %751
      %753 = vrot.lane.b32.xlu0 %v352, 32
      %v754 = vpop.permute.xlu0 %753
      %755 = vrot.lane.b32.xlu0 %v354, 32
      %v756 = vpop.permute.xlu0 %755
      %757 = vrot.lane.b32.xlu0 %v357, 32
      %v758 = vpop.permute.xlu0 %757
      %759 = vrot.lane.b32.xlu0 %v359, 32
      %v760 = vpop.permute.xlu0 %759
      %761 = vrot.lane.b32.xlu0 %v436, 32
      %v762 = vpop.permute.xlu0 %761
      %763 = vrot.lane.b32.xlu0 %v438, 32
      %v764 = vpop.permute.xlu0 %763
      %793 = vrot.lane.b32.xlu0 %v368, 40
      %v794 = vpop.permute.xlu0 %793
      %795 = vrot.lane.b32.xlu0 %v370, 40
      %v796 = vpop.permute.xlu0 %795
      %797 = vrot.lane.b32.xlu0 %v373, 40
      %v798 = vpop.permute.xlu0 %797
      %799 = vrot.lane.b32.xlu0 %v375, 40
      %v800 = vpop.permute.xlu0 %799
      %801 = vrot.lane.b32.xlu0 %v378, 40
      %v802 = vpop.permute.xlu0 %801
      %803 = vrot.lane.b32.xlu0 %v380, 40
      %v804 = vpop.permute.xlu0 %803
      %805 = vrot.lane.b32.xlu0 %v383, 40
      %v806 = vpop.permute.xlu0 %805
      %807 = vrot.lane.b32.xlu0 %v385, 40
      %v808 = vpop.permute.xlu0 %807
      %809 = vrot.lane.b32.xlu0 %v388, 40
      %v810 = vpop.permute.xlu0 %809
      %811 = vrot.lane.b32.xlu0 %v390, 40
      %v812 = vpop.permute.xlu0 %811
      %813 = vrot.lane.b32.xlu0 %v393, 40
      %v814 = vpop.permute.xlu0 %813
      %815 = vrot.lane.b32.xlu0 %v395, 40
      %v816 = vpop.permute.xlu0 %815
      %817 = vrot.lane.b32.xlu0 %v398, 40
      %v818 = vpop.permute.xlu0 %817
      %819 = vrot.lane.b32.xlu0 %v400, 40
      %v820 = vpop.permute.xlu0 %819
      %821 = vrot.lane.b32.xlu0 %v403, 40
      %v822 = vpop.permute.xlu0 %821
      %823 = vrot.lane.b32.xlu0 %v405, 40
      %v824 = vpop.permute.xlu0 %823
      %825 = vrot.lane.b32.xlu0 %v408, 40
      %v826 = vpop.permute.xlu0 %825
      %827 = vrot.lane.b32.xlu0 %v410, 40
      %v828 = vpop.permute.xlu0 %827
      %829 = vrot.lane.b32.xlu0 %v413, 40
      %v830 = vpop.permute.xlu0 %829
      %831 = vrot.lane.b32.xlu0 %v415, 40
      %v832 = vpop.permute.xlu0 %831
      %833 = vrot.lane.b32.xlu0 %v418, 40
      %v834 = vpop.permute.xlu0 %833
      %835 = vrot.lane.b32.xlu0 %v420, 40
      %v836 = vpop.permute.xlu0 %835
      %837 = vrot.lane.b32.xlu0 %v423, 40
      %v838 = vpop.permute.xlu0 %837
      %839 = vrot.lane.b32.xlu0 %v425, 40
      %v840 = vpop.permute.xlu0 %839
      %841 = vrot.lane.b32.xlu0 %v428, 40
      %v842 = vpop.permute.xlu0 %841
      %843 = vrot.lane.b32.xlu0 %v430, 40
      %v844 = vpop.permute.xlu0 %843
      %845 = vrot.lane.b32.xlu0 %v441, 40
      %v846 = vpop.permute.xlu0 %845
      %847 = vrot.lane.b32.xlu0 %v443, 40
      %v848 = vpop.permute.xlu0 %847
      %877 = vrot.lane.b32.xlu0 %v205, 48
      %v878 = vpop.permute.xlu0 %877
      %879 = vrot.lane.b32.xlu0 %v206, 48
      %v880 = vpop.permute.xlu0 %879
      %881 = vrot.lane.b32.xlu0 %v208, 48
      %v882 = vpop.permute.xlu0 %881
      %883 = vrot.lane.b32.xlu0 %v209, 48
      %v884 = vpop.permute.xlu0 %883
      %885 = vrot.lane.b32.xlu0 %v211, 48
      %v886 = vpop.permute.xlu0 %885
      %887 = vrot.lane.b32.xlu0 %v212, 48
      %v888 = vpop.permute.xlu0 %887
      %889 = vrot.lane.b32.xlu0 %v214, 48
      %v890 = vpop.permute.xlu0 %889
      %891 = vrot.lane.b32.xlu0 %v215, 48
      %v892 = vpop.permute.xlu0 %891
      %893 = vrot.lane.b32.xlu0 %v217, 48
      %v894 = vpop.permute.xlu0 %893
      %895 = vrot.lane.b32.xlu0 %v218, 48
      %v896 = vpop.permute.xlu0 %895
      %897 = vrot.lane.b32.xlu0 %v220, 48
      %v898 = vpop.permute.xlu0 %897
      %899 = vrot.lane.b32.xlu0 %v221, 48
      %v900 = vpop.permute.xlu0 %899
      %901 = vrot.lane.b32.xlu0 %v223, 48
      %v902 = vpop.permute.xlu0 %901
      %903 = vrot.lane.b32.xlu0 %v224, 48
      %v904 = vpop.permute.xlu0 %903
      %905 = vrot.lane.b32.xlu0 %v226, 48
      %v906 = vpop.permute.xlu0 %905
      %907 = vrot.lane.b32.xlu0 %v227, 48
      %v908 = vpop.permute.xlu0 %907
      %909 = vrot.lane.b32.xlu0 %v229, 48
      %v910 = vpop.permute.xlu0 %909
      %911 = vrot.lane.b32.xlu0 %v230, 48
      %v912 = vpop.permute.xlu0 %911
      %913 = vrot.lane.b32.xlu0 %v232, 48
      %v914 = vpop.permute.xlu0 %913
      %915 = vrot.lane.b32.xlu0 %v233, 48
      %v916 = vpop.permute.xlu0 %915
      %917 = vrot.lane.b32.xlu0 %v235, 48
      %v918 = vpop.permute.xlu0 %917
      %919 = vrot.lane.b32.xlu0 %v236, 48
      %v920 = vpop.permute.xlu0 %919
      %921 = vrot.lane.b32.xlu0 %v238, 48
      %v922 = vpop.permute.xlu0 %921
      %923 = vrot.lane.b32.xlu0 %v239, 48
      %v924 = vpop.permute.xlu0 %923
      %925 = vrot.lane.b32.xlu0 %v241, 48
      %v926 = vpop.permute.xlu0 %925
      %927 = vrot.lane.b32.xlu0 %v242, 48
      %v928 = vpop.permute.xlu0 %927
      %929 = vrot.lane.b32.xlu0 %v244, 48
      %v930 = vpop.permute.xlu0 %929
      %931 = vrot.lane.b32.xlu0 %v245, 48
      %v932 = vpop.permute.xlu0 %931
      %961 = vrot.lane.b32.xlu0 %v302, 56
      %v962 = vpop.permute.xlu0 %961
      %963 = vrot.lane.b32.xlu0 %v304, 56
      %v964 = vpop.permute.xlu0 %963
      %965 = vrot.lane.b32.xlu0 %v307, 56
      %v966 = vpop.permute.xlu0 %965
      %967 = vrot.lane.b32.xlu0 %v309, 56
      %v968 = vpop.permute.xlu0 %967
      %969 = vrot.lane.b32.xlu0 %v312, 56
      %v970 = vpop.permute.xlu0 %969
      %971 = vrot.lane.b32.xlu0 %v314, 56
      %v972 = vpop.permute.xlu0 %971
      %973 = vrot.lane.b32.xlu0 %v317, 56
      %v974 = vpop.permute.xlu0 %973
      %975 = vrot.lane.b32.xlu0 %v319, 56
      %v976 = vpop.permute.xlu0 %975
      %977 = vrot.lane.b32.xlu0 %v322, 56
      %v978 = vpop.permute.xlu0 %977
      %979 = vrot.lane.b32.xlu0 %v324, 56
      %v980 = vpop.permute.xlu0 %979
      %981 = vrot.lane.b32.xlu0 %v327, 56
      %v982 = vpop.permute.xlu0 %981
      %983 = vrot.lane.b32.xlu0 %v329, 56
      %v984 = vpop.permute.xlu0 %983
      %985 = vrot.lane.b32.xlu0 %v332, 56
      %v986 = vpop.permute.xlu0 %985
      %987 = vrot.lane.b32.xlu0 %v334, 56
      %v988 = vpop.permute.xlu0 %987
      %989 = vrot.lane.b32.xlu0 %v337, 56
      %v990 = vpop.permute.xlu0 %989
      %991 = vrot.lane.b32.xlu0 %v339, 56
      %v992 = vpop.permute.xlu0 %991
      %993 = vrot.lane.b32.xlu0 %v342, 56
      %v994 = vpop.permute.xlu0 %993
      %995 = vrot.lane.b32.xlu0 %v344, 56
      %v996 = vpop.permute.xlu0 %995
      %997 = vrot.lane.b32.xlu0 %v347, 56
      %v998 = vpop.permute.xlu0 %997
      %999 = vrot.lane.b32.xlu0 %v349, 56
      %v1000 = vpop.permute.xlu0 %999
      %1001 = vrot.lane.b32.xlu0 %v352, 56
      %v1002 = vpop.permute.xlu0 %1001
      %1003 = vrot.lane.b32.xlu0 %v354, 56
      %v1004 = vpop.permute.xlu0 %1003
      %1005 = vrot.lane.b32.xlu0 %v357, 56
      %v1006 = vpop.permute.xlu0 %1005
      %1007 = vrot.lane.b32.xlu0 %v359, 56
      %v1008 = vpop.permute.xlu0 %1007
      %1009 = vrot.lane.b32.xlu0 %v436, 56
      %v1010 = vpop.permute.xlu0 %1009
      %1011 = vrot.lane.b32.xlu0 %v438, 56
      %v1012 = vpop.permute.xlu0 %1011
      %1013 = vrot.lane.b32.xlu0 %v449, 56
      %v1014 = vpop.permute.xlu0 %1013
      %1015 = vrot.lane.b32.xlu0 %v451, 56
      %v1016 = vpop.permute.xlu0 %1015
      %1045 = vrot.lane.b32.xlu0 %v373, 64
      %v1046 = vpop.permute.xlu0 %1045
      %1047 = vrot.lane.b32.xlu0 %v375, 64
      %v1048 = vpop.permute.xlu0 %1047
      %1049 = vrot.lane.b32.xlu0 %v378, 64
      %v1050 = vpop.permute.xlu0 %1049
      %1051 = vrot.lane.b32.xlu0 %v380, 64
      %v1052 = vpop.permute.xlu0 %1051
      %1053 = vrot.lane.b32.xlu0 %v383, 64
      %v1054 = vpop.permute.xlu0 %1053
      %1055 = vrot.lane.b32.xlu0 %v385, 64
      %v1056 = vpop.permute.xlu0 %1055
      %1057 = vrot.lane.b32.xlu0 %v388, 64
      %v1058 = vpop.permute.xlu0 %1057
      %1059 = vrot.lane.b32.xlu0 %v390, 64
      %v1060 = vpop.permute.xlu0 %1059
      %1061 = vrot.lane.b32.xlu0 %v393, 64
      %v1062 = vpop.permute.xlu0 %1061
      %1063 = vrot.lane.b32.xlu0 %v395, 64
      %v1064 = vpop.permute.xlu0 %1063
      %1065 = vrot.lane.b32.xlu0 %v398, 64
      %v1066 = vpop.permute.xlu0 %1065
      %1067 = vrot.lane.b32.xlu0 %v400, 64
      %v1068 = vpop.permute.xlu0 %1067
      %1069 = vrot.lane.b32.xlu0 %v403, 64
      %v1070 = vpop.permute.xlu0 %1069
      %1071 = vrot.lane.b32.xlu0 %v405, 64
      %v1072 = vpop.permute.xlu0 %1071
      %1073 = vrot.lane.b32.xlu0 %v408, 64
      %v1074 = vpop.permute.xlu0 %1073
      %1075 = vrot.lane.b32.xlu0 %v410, 64
      %v1076 = vpop.permute.xlu0 %1075
      %1077 = vrot.lane.b32.xlu0 %v413, 64
      %v1078 = vpop.permute.xlu0 %1077
      %1079 = vrot.lane.b32.xlu0 %v415, 64
      %v1080 = vpop.permute.xlu0 %1079
      %1081 = vrot.lane.b32.xlu0 %v418, 64
      %v1082 = vpop.permute.xlu0 %1081
      %1083 = vrot.lane.b32.xlu0 %v420, 64
      %v1084 = vpop.permute.xlu0 %1083
      %1085 = vrot.lane.b32.xlu0 %v423, 64
      %v1086 = vpop.permute.xlu0 %1085
      %1087 = vrot.lane.b32.xlu0 %v425, 64
      %v1088 = vpop.permute.xlu0 %1087
      %1089 = vrot.lane.b32.xlu0 %v428, 64
      %v1090 = vpop.permute.xlu0 %1089
      %1091 = vrot.lane.b32.xlu0 %v430, 64
      %v1092 = vpop.permute.xlu0 %1091
      %1093 = vrot.lane.b32.xlu0 %v441, 64
      %v1094 = vpop.permute.xlu0 %1093
      %1095 = vrot.lane.b32.xlu0 %v443, 64
      %v1096 = vpop.permute.xlu0 %1095
      %1097 = vrot.lane.b32.xlu0 %v454, 64
      %v1098 = vpop.permute.xlu0 %1097
      %1099 = vrot.lane.b32.xlu0 %v456, 64
      %v1100 = vpop.permute.xlu0 %1099
      %vm1129 = vcmask 64512
      %v1130 = vsel %vm1129, %v199, %v458
      %v1131 = vsel %vm1129, %v200, %v460
      %v1132 = vsel %vm1129, %v202, %v462
      %v1133 = vsel %vm1129, %v203, %v464
      %v1134 = vsel %vm1129, %v205, %v466
      %v1135 = vsel %vm1129, %v206, %v468
      %v1136 = vsel %vm1129, %v208, %v470
      %v1137 = vsel %vm1129, %v209, %v472
      %v1138 = vsel %vm1129, %v211, %v474
      %v1139 = vsel %vm1129, %v212, %v476
      %v1140 = vsel %vm1129, %v214, %v478
      %v1141 = vsel %vm1129, %v215, %v480
      %v1142 = vsel %vm1129, %v217, %v482
      %v1143 = vsel %vm1129, %v218, %v484
      %v1144 = vsel %vm1129, %v220, %v486
      %v1145 = vsel %vm1129, %v221, %v488
      %v1146 = vsel %vm1129, %v223, %v490
      %v1147 = vsel %vm1129, %v224, %v492
      %v1148 = vsel %vm1129, %v226, %v494
      %v1149 = vsel %vm1129, %v227, %v496
      %v1150 = vsel %vm1129, %v229, %v498
      %v1151 = vsel %vm1129, %v230, %v500
      %v1152 = vsel %vm1129, %v232, %v502
      %v1153 = vsel %vm1129, %v233, %v504
      %v1154 = vsel %vm1129, %v235, %v506
      %v1155 = vsel %vm1129, %v236, %v508
      %v1156 = vsel %vm1129, %v238, %v510
      %v1157 = vsel %vm1129, %v239, %v512
      %vm1158 = vcmask 130048
      %v1159 = vsel %vm1158, %v1130, %v542
      %v1160 = vsel %vm1158, %v1131, %v544
      %v1161 = vsel %vm1158, %v1132, %v546
      %v1162 = vsel %vm1158, %v1133, %v548
      %v1163 = vsel %vm1158, %v1134, %v550
      %v1164 = vsel %vm1158, %v1135, %v552
      %v1165 = vsel %vm1158, %v1136, %v554
      %v1166 = vsel %vm1158, %v1137, %v556
      %v1167 = vsel %vm1158, %v1138, %v558
      %v1168 = vsel %vm1158, %v1139, %v560
      %v1169 = vsel %vm1158, %v1140, %v562
      %v1170 = vsel %vm1158, %v1141, %v564
      %v1171 = vsel %vm1158, %v1142, %v566
      %v1172 = vsel %vm1158, %v1143, %v568
      %v1173 = vsel %vm1158, %v1144, %v570
      %v1174 = vsel %vm1158, %v1145, %v572
      %v1175 = vsel %vm1158, %v1146, %v574
      %v1176 = vsel %vm1158, %v1147, %v576
      %v1177 = vsel %vm1158, %v1148, %v578
      %v1178 = vsel %vm1158, %v1149, %v580
      %v1179 = vsel %vm1158, %v1150, %v582
      %v1180 = vsel %vm1158, %v1151, %v584
      %v1181 = vsel %vm1158, %v1152, %v586
      %v1182 = vsel %vm1158, %v1153, %v588
      %v1183 = vsel %vm1158, %v1154, %v590
      %v1184 = vsel %vm1158, %v1155, %v592
      %v1185 = vsel %vm1158, %v1156, %v594
      %v1186 = vsel %vm1158, %v1157, %v596
      %vm1187 = vcmask 195584
      %v1188 = vsel %vm1187, %v1159, %v626
      %v1189 = vsel %vm1187, %v1160, %v628
      %v1190 = vsel %vm1187, %v1161, %v630
      %v1191 = vsel %vm1187, %v1162, %v632
      %v1192 = vsel %vm1187, %v1163, %v634
      %v1193 = vsel %vm1187, %v1164, %v636
      %v1194 = vsel %vm1187, %v1165, %v638
      %v1195 = vsel %vm1187, %v1166, %v640
      %v1196 = vsel %vm1187, %v1167, %v642
      %v1197 = vsel %vm1187, %v1168, %v644
      %v1198 = vsel %vm1187, %v1169, %v646
      %v1199 = vsel %vm1187, %v1170, %v648
      %v1200 = vsel %vm1187, %v1171, %v650
      %v1201 = vsel %vm1187, %v1172, %v652
      %v1202 = vsel %vm1187, %v1173, %v654
      %v1203 = vsel %vm1187, %v1174, %v656
      %v1204 = vsel %vm1187, %v1175, %v658
      %v1205 = vsel %vm1187, %v1176, %v660
      %v1206 = vsel %vm1187, %v1177, %v662
      %v1207 = vsel %vm1187, %v1178, %v664
      %v1208 = vsel %vm1187, %v1179, %v666
      %v1209 = vsel %vm1187, %v1180, %v668
      %v1210 = vsel %vm1187, %v1181, %v670
      %v1211 = vsel %vm1187, %v1182, %v672
      %v1212 = vsel %vm1187, %v1183, %v674
      %v1213 = vsel %vm1187, %v1184, %v676
      %v1214 = vsel %vm1187, %v1185, %v678
      %v1215 = vsel %vm1187, %v1186, %v680
      %vm1216 = vcmask 261120
      %v1217 = vsel %vm1216, %v1188, %v710
      %v1218 = vsel %vm1216, %v1189, %v712
      %v1219 = vsel %vm1216, %v1190, %v714
      %v1220 = vsel %vm1216, %v1191, %v716
      %v1221 = vsel %vm1216, %v1192, %v718
      %v1222 = vsel %vm1216, %v1193, %v720
      %v1223 = vsel %vm1216, %v1194, %v722
      %v1224 = vsel %vm1216, %v1195, %v724
      %v1225 = vsel %vm1216, %v1196, %v726
      %v1226 = vsel %vm1216, %v1197, %v728
      %v1227 = vsel %vm1216, %v1198, %v730
      %v1228 = vsel %vm1216, %v1199, %v732
      %v1229 = vsel %vm1216, %v1200, %v734
      %v1230 = vsel %vm1216, %v1201, %v736
      %v1231 = vsel %vm1216, %v1202, %v738
      %v1232 = vsel %vm1216, %v1203, %v740
      %v1233 = vsel %vm1216, %v1204, %v742
      %v1234 = vsel %vm1216, %v1205, %v744
      %v1235 = vsel %vm1216, %v1206, %v746
      %v1236 = vsel %vm1216, %v1207, %v748
      %v1237 = vsel %vm1216, %v1208, %v750
      %v1238 = vsel %vm1216, %v1209, %v752
      %v1239 = vsel %vm1216, %v1210, %v754
      %v1240 = vsel %vm1216, %v1211, %v756
      %v1241 = vsel %vm1216, %v1212, %v758
      %v1242 = vsel %vm1216, %v1213, %v760
      %v1243 = vsel %vm1216, %v1214, %v762
      %v1244 = vsel %vm1216, %v1215, %v764
      %vm1245 = vcmask 326656
      %v1246 = vsel %vm1245, %v1217, %v794
      %v1247 = vsel %vm1245, %v1218, %v796
      %v1248 = vsel %vm1245, %v1219, %v798
      %v1249 = vsel %vm1245, %v1220, %v800
      %v1250 = vsel %vm1245, %v1221, %v802
      %v1251 = vsel %vm1245, %v1222, %v804
      %v1252 = vsel %vm1245, %v1223, %v806
      %v1253 = vsel %vm1245, %v1224, %v808
      %v1254 = vsel %vm1245, %v1225, %v810
      %v1255 = vsel %vm1245, %v1226, %v812
      %v1256 = vsel %vm1245, %v1227, %v814
      %v1257 = vsel %vm1245, %v1228, %v816
      %v1258 = vsel %vm1245, %v1229, %v818
      %v1259 = vsel %vm1245, %v1230, %v820
      %v1260 = vsel %vm1245, %v1231, %v822
      %v1261 = vsel %vm1245, %v1232, %v824
      %v1262 = vsel %vm1245, %v1233, %v826
      %v1263 = vsel %vm1245, %v1234, %v828
      %v1264 = vsel %vm1245, %v1235, %v830
      %v1265 = vsel %vm1245, %v1236, %v832
      %v1266 = vsel %vm1245, %v1237, %v834
      %v1267 = vsel %vm1245, %v1238, %v836
      %v1268 = vsel %vm1245, %v1239, %v838
      %v1269 = vsel %vm1245, %v1240, %v840
      %v1270 = vsel %vm1245, %v1241, %v842
      %v1271 = vsel %vm1245, %v1242, %v844
      %v1272 = vsel %vm1245, %v1243, %v846
      %v1273 = vsel %vm1245, %v1244, %v848
      %vm1274 = vcmask 392192
      %v1275 = vsel %vm1274, %v1246, %v878
      %v1276 = vsel %vm1274, %v1247, %v880
      %v1277 = vsel %vm1274, %v1248, %v882
      %v1278 = vsel %vm1274, %v1249, %v884
      %v1279 = vsel %vm1274, %v1250, %v886
      %v1280 = vsel %vm1274, %v1251, %v888
      %v1281 = vsel %vm1274, %v1252, %v890
      %v1282 = vsel %vm1274, %v1253, %v892
      %v1283 = vsel %vm1274, %v1254, %v894
      %v1284 = vsel %vm1274, %v1255, %v896
      %v1285 = vsel %vm1274, %v1256, %v898
      %v1286 = vsel %vm1274, %v1257, %v900
      %v1287 = vsel %vm1274, %v1258, %v902
      %v1288 = vsel %vm1274, %v1259, %v904
      %v1289 = vsel %vm1274, %v1260, %v906
      %v1290 = vsel %vm1274, %v1261, %v908
      %v1291 = vsel %vm1274, %v1262, %v910
      %v1292 = vsel %vm1274, %v1263, %v912
      %v1293 = vsel %vm1274, %v1264, %v914
      %v1294 = vsel %vm1274, %v1265, %v916
      %v1295 = vsel %vm1274, %v1266, %v918
      %v1296 = vsel %vm1274, %v1267, %v920
      %v1297 = vsel %vm1274, %v1268, %v922
      %v1298 = vsel %vm1274, %v1269, %v924
      %v1299 = vsel %vm1274, %v1270, %v926
      %v1300 = vsel %vm1274, %v1271, %v928
      %v1301 = vsel %vm1274, %v1272, %v930
      %v1302 = vsel %vm1274, %v1273, %v932
      %vm1303 = vcmask 457728
      %v1304 = vsel %vm1303, %v1275, %v962
      %v1305 = vsel %vm1303, %v1276, %v964
      %v1306 = vsel %vm1303, %v1277, %v966
      %v1307 = vsel %vm1303, %v1278, %v968
      %v1308 = vsel %vm1303, %v1279, %v970
      %v1309 = vsel %vm1303, %v1280, %v972
      %v1310 = vsel %vm1303, %v1281, %v974
      %v1311 = vsel %vm1303, %v1282, %v976
      %v1312 = vsel %vm1303, %v1283, %v978
      %v1313 = vsel %vm1303, %v1284, %v980
      %v1314 = vsel %vm1303, %v1285, %v982
      %v1315 = vsel %vm1303, %v1286, %v984
      %v1316 = vsel %vm1303, %v1287, %v986
      %v1317 = vsel %vm1303, %v1288, %v988
      %v1318 = vsel %vm1303, %v1289, %v990
      %v1319 = vsel %vm1303, %v1290, %v992
      %v1320 = vsel %vm1303, %v1291, %v994
      %v1321 = vsel %vm1303, %v1292, %v996
      %v1322 = vsel %vm1303, %v1293, %v998
      %v1323 = vsel %vm1303, %v1294, %v1000
      %v1324 = vsel %vm1303, %v1295, %v1002
      %v1325 = vsel %vm1303, %v1296, %v1004
      %v1326 = vsel %vm1303, %v1297, %v1006
      %v1327 = vsel %vm1303, %v1298, %v1008
      %v1328 = vsel %vm1303, %v1299, %v1010
      %v1329 = vsel %vm1303, %v1300, %v1012
      %v1330 = vsel %vm1303, %v1301, %v1014
      %v1331 = vsel %vm1303, %v1302, %v1016
      %vm1332 = vcmask 523264
      %v1333 = vsel %vm1332, %v1304, %v1046
      %v1334 = vsel %vm1332, %v1305, %v1048
      %v1335 = vsel %vm1332, %v1306, %v1050
      %v1336 = vsel %vm1332, %v1307, %v1052
      %v1337 = vsel %vm1332, %v1308, %v1054
      %v1338 = vsel %vm1332, %v1309, %v1056
      %v1339 = vsel %vm1332, %v1310, %v1058
      %v1340 = vsel %vm1332, %v1311, %v1060
      %v1341 = vsel %vm1332, %v1312, %v1062
      %v1342 = vsel %vm1332, %v1313, %v1064
      %v1343 = vsel %vm1332, %v1314, %v1066
      %v1344 = vsel %vm1332, %v1315, %v1068
      %v1345 = vsel %vm1332, %v1316, %v1070
      %v1346 = vsel %vm1332, %v1317, %v1072
      %v1347 = vsel %vm1332, %v1318, %v1074
      %v1348 = vsel %vm1332, %v1319, %v1076
      %v1349 = vsel %vm1332, %v1320, %v1078
      %v1350 = vsel %vm1332, %v1321, %v1080
      %v1351 = vsel %vm1332, %v1322, %v1082
      %v1352 = vsel %vm1332, %v1323, %v1084
      %v1353 = vsel %vm1332, %v1324, %v1086
      %v1354 = vsel %vm1332, %v1325, %v1088
      %v1355 = vsel %vm1332, %v1326, %v1090
      %v1356 = vsel %vm1332, %v1327, %v1092
      %v1357 = vsel %vm1332, %v1328, %v1094
      %v1358 = vsel %vm1332, %v1329, %v1096
      %v1359 = vsel %vm1332, %v1330, %v1098
      %v1360 = vsel %vm1332, %v1331, %v1100
      %v1361 = vld [vmem:[%s1] sm:$0xff]
      %v1362 = vld [vmem:[%s1 + $0x8] sm:$0xff]
      %v1363 = vld [vmem:[%s1 + $0x10] sm:$0xff]
      %v1364 = vld [vmem:[%s1 + $0x18] sm:$0xff]
      %v1365 = vld [vmem:[%s1 + $0x20] sm:$0xff]
      %v1366 = vld [vmem:[%s1 + $0x28] sm:$0xff]
      %v1367 = vld [vmem:[%s1 + $0x30] sm:$0xff]
      %v1368 = vld [vmem:[%s1 + $0x38] sm:$0xff]
      %v1369 = vld [vmem:[%s1 + $0x40] sm:$0xff]
      %v1370 = vld [vmem:[%s2] sm:$0x1]
      %v1372 = vperm.slane %v1370, 0
      %vm1374 = vcmask 588800
      %v1376 = vsel %vm1374, %v1333, 0
      %v1379 = vsel %vm1374, %v1334, 0
      %v1382 = vsel %vm1374, %v1335, 0
      %v1385 = vsel %vm1374, %v1336, 0
      %v1388 = vsel %vm1374, %v1337, 0
      %v1391 = vsel %vm1374, %v1338, 0
      %v1394 = vsel %vm1374, %v1339, 0
      %v1397 = vsel %vm1374, %v1340, 0
      %v1400 = vsel %vm1374, %v1341, 0
      %v1403 = vsel %vm1374, %v1342, 0
      %v1406 = vsel %vm1374, %v1343, 0
      %v1409 = vsel %vm1374, %v1344, 0
      %v1412 = vsel %vm1374, %v1345, 0
      %v1415 = vsel %vm1374, %v1346, 0
      %v1418 = vsel %vm1374, %v1347, 0
      %v1421 = vsel %vm1374, %v1348, 0
      %v1424 = vsel %vm1374, %v1349, 0
      %v1427 = vsel %vm1374, %v1350, 0
      %v1430 = vsel %vm1374, %v1351, 0
      %v1433 = vsel %vm1374, %v1352, 0
      %v1436 = vsel %vm1374, %v1353, 0
      %v1439 = vsel %vm1374, %v1354, 0
      %v1442 = vsel %vm1374, %v1355, 0
      %v1445 = vsel %vm1374, %v1356, 0
      %v1448 = vsel %vm1374, %v1357, 0
      %v1451 = vsel %vm1374, %v1358, 0
      %v1454 = vsel %vm1374, %v1359, 0
      %v1457 = vsel %vm1374, %v1360, 0
      %1459 = vmatpush.msra.mxu0 0.0
      %1460 = vmatpush.msra.mxu0 0.0
      %1461 = vmatpush.msra.mxu0 0.0
      %1462 = vmatpush.msra.mxu0 0.0
      %1463 = vmatpush.msra.mxu0 0.0
      %1464 = vmatpush.msra.mxu0 0.0
      %1465 = vmatpush.msra.mxu0 0.0
      %1466 = vmatpush.msra.mxu0 %v1369
      %1467 = vmatpush.msra.mxu0 %v1368
      %1468 = vmatpush.msra.mxu0 %v1367
      %1469 = vmatpush.msra.mxu0 %v1366
      %1470 = vmatpush.msra.mxu0 %v1365
      %1471 = vmatpush.msra.mxu0 %v1364
      %1472 = vmatpush.msra.mxu0 %v1363
      %1473 = vmatpush.msra.mxu0 %v1362
      %1474 = vmatpush.msra.mxu0 %v1361
      %1475 = vmatmul.f32.gmra.mxu0 %v1376
      %v1476 = vpop.f32.mrf.mxu0
      %v1477 = vadd.f32 %v1372, %v1476
      %1478 = vmatmul.f32.gmra.mxu0 %v1379
      %v1479 = vpop.f32.mrf.mxu0
      %v1480 = vadd.f32 %v1372, %v1479
      %1481 = vmatmul.f32.gmra.mxu0 %v1382
      %v1482 = vpop.f32.mrf.mxu0
      %v1483 = vadd.f32 %v1372, %v1482
      %1484 = vmatmul.f32.gmra.mxu0 %v1385
      %v1485 = vpop.f32.mrf.mxu0
      %v1486 = vadd.f32 %v1372, %v1485
      %1487 = vmatmul.f32.gmra.mxu0 %v1388
      %v1488 = vpop.f32.mrf.mxu0
      %v1489 = vadd.f32 %v1372, %v1488
      %1490 = vmatmul.f32.gmra.mxu0 %v1391
      %v1491 = vpop.f32.mrf.mxu0
      %v1492 = vadd.f32 %v1372, %v1491
      %1493 = vmatmul.f32.gmra.mxu0 %v1394
      %v1494 = vpop.f32.mrf.mxu0
      %v1495 = vadd.f32 %v1372, %v1494
      %1496 = vmatmul.f32.gmra.mxu0 %v1397
      %v1497 = vpop.f32.mrf.mxu0
      %v1498 = vadd.f32 %v1372, %v1497
      %1499 = vmatmul.f32.gmra.mxu0 %v1400
      %v1500 = vpop.f32.mrf.mxu0
      %v1501 = vadd.f32 %v1372, %v1500
      %1502 = vmatmul.f32.gmra.mxu0 %v1403
      %v1503 = vpop.f32.mrf.mxu0
      %v1504 = vadd.f32 %v1372, %v1503
      %1505 = vmatmul.f32.gmra.mxu0 %v1406
      %v1506 = vpop.f32.mrf.mxu0
      %v1507 = vadd.f32 %v1372, %v1506
      %1508 = vmatmul.f32.gmra.mxu0 %v1409
      %v1509 = vpop.f32.mrf.mxu0
      %v1510 = vadd.f32 %v1372, %v1509
      %1511 = vmatmul.f32.gmra.mxu0 %v1412
      %v1512 = vpop.f32.mrf.mxu0
      %v1513 = vadd.f32 %v1372, %v1512
      %1514 = vmatmul.f32.gmra.mxu0 %v1415
      %v1515 = vpop.f32.mrf.mxu0
      %v1516 = vadd.f32 %v1372, %v1515
      %1517 = vmatmul.f32.gmra.mxu0 %v1418
      %v1518 = vpop.f32.mrf.mxu0
      %v1519 = vadd.f32 %v1372, %v1518
      %1520 = vmatmul.f32.gmra.mxu0 %v1421
      %v1521 = vpop.f32.mrf.mxu0
      %v1522 = vadd.f32 %v1372, %v1521
      %1523 = vmatmul.f32.gmra.mxu0 %v1424
      %v1524 = vpop.f32.mrf.mxu0
      %v1525 = vadd.f32 %v1372, %v1524
      %1526 = vmatmul.f32.gmra.mxu0 %v1427
      %v1527 = vpop.f32.mrf.mxu0
      %v1528 = vadd.f32 %v1372, %v1527
      %1529 = vmatmul.f32.gmra.mxu0 %v1430
      %v1530 = vpop.f32.mrf.mxu0
      %v1531 = vadd.f32 %v1372, %v1530
      %1532 = vmatmul.f32.gmra.mxu0 %v1433
      %v1533 = vpop.f32.mrf.mxu0
      %v1534 = vadd.f32 %v1372, %v1533
      %1535 = vmatmul.f32.gmra.mxu0 %v1436
      %v1536 = vpop.f32.mrf.mxu0
      %v1537 = vadd.f32 %v1372, %v1536
      %1538 = vmatmul.f32.gmra.mxu0 %v1439
      %v1539 = vpop.f32.mrf.mxu0
      %v1540 = vadd.f32 %v1372, %v1539
      %1541 = vmatmul.f32.gmra.mxu0 %v1442
      %v1542 = vpop.f32.mrf.mxu0
      %v1543 = vadd.f32 %v1372, %v1542
      %1544 = vmatmul.f32.gmra.mxu0 %v1445
      %v1545 = vpop.f32.mrf.mxu0
      %v1546 = vadd.f32 %v1372, %v1545
      %1547 = vmatmul.f32.gmra.mxu0 %v1448
      %v1548 = vpop.f32.mrf.mxu0
      %v1549 = vadd.f32 %v1372, %v1548
      %1550 = vmatmul.f32.gmra.mxu0 %v1451
      %v1551 = vpop.f32.mrf.mxu0
      %v1552 = vadd.f32 %v1372, %v1551
      %1553 = vmatmul.f32.gmra.mxu0 %v1454
      %v1554 = vpop.f32.mrf.mxu0
      %v1555 = vadd.f32 %v1372, %v1554
      %1556 = vmatmul.f32.gmra.mxu0 %v1457
      %v1557 = vpop.f32.mrf.mxu0
      %v1558 = vadd.f32 %v1372, %v1557
      %1559 = vdwg.mxu0
      %vm1560 = vcmask 31744
      %1561 = vst.msk [vmem:[%s194] sm:$0xff] %vm1560, %v1477
      %1562 = vst.msk [vmem:[%s194 + $0x8] sm:$0xff] %vm1560, %v1480
      %1563 = vst.msk [vmem:[%s194 + $0x10] sm:$0xff] %vm1560, %v1483
      %1564 = vst.msk [vmem:[%s194 + $0x18] sm:$0xff] %vm1560, %v1486
      %1565 = vst.msk [vmem:[%s194 + $0x20] sm:$0xff] %vm1560, %v1489
      %1566 = vst.msk [vmem:[%s194 + $0x28] sm:$0xff] %vm1560, %v1492
      %1567 = vst.msk [vmem:[%s194 + $0x30] sm:$0xff] %vm1560, %v1495
      %1568 = vst.msk [vmem:[%s194 + $0x38] sm:$0xff] %vm1560, %v1498
      %1569 = vst.msk [vmem:[%s194 + $0x40] sm:$0xff] %vm1560, %v1501
      %1570 = vst.msk [vmem:[%s194 + $0x48] sm:$0xff] %vm1560, %v1504
      %1571 = vst.msk [vmem:[%s194 + $0x50] sm:$0xff] %vm1560, %v1507
      %1572 = vst.msk [vmem:[%s194 + $0x58] sm:$0xff] %vm1560, %v1510
      %1573 = vst.msk [vmem:[%s194 + $0x60] sm:$0xff] %vm1560, %v1513
      %1574 = vst.msk [vmem:[%s194 + $0x68] sm:$0xff] %vm1560, %v1516
      %1575 = vst.msk [vmem:[%s194 + $0x70] sm:$0xff] %vm1560, %v1519
      %1576 = vst.msk [vmem:[%s194 + $0x78] sm:$0xff] %vm1560, %v1522
      %1577 = vst.msk [vmem:[%s194 + $0x80] sm:$0xff] %vm1560, %v1525
      %1578 = vst.msk [vmem:[%s194 + $0x88] sm:$0xff] %vm1560, %v1528
      %1579 = vst.msk [vmem:[%s194 + $0x90] sm:$0xff] %vm1560, %v1531
      %1580 = vst.msk [vmem:[%s194 + $0x98] sm:$0xff] %vm1560, %v1534
      %1581 = vst.msk [vmem:[%s194 + $0xa0] sm:$0xff] %vm1560, %v1537
      %1582 = vst.msk [vmem:[%s194 + $0xa8] sm:$0xff] %vm1560, %v1540
      %1583 = vst.msk [vmem:[%s194 + $0xb0] sm:$0xff] %vm1560, %v1543
      %1584 = vst.msk [vmem:[%s194 + $0xb8] sm:$0xff] %vm1560, %v1546
      %1585 = vst.msk [vmem:[%s194 + $0xc0] sm:$0xff] %vm1560, %v1549
      %1586 = vst.msk [vmem:[%s194 + $0xc8] sm:$0xff] %vm1560, %v1552
      %1587 = vst.msk [vmem:[%s194 + $0xd0] sm:$0xff] %vm1560, %v1555
      %1588 = vst.msk [vmem:[%s194 + $0xd8] sm:$0xff] %vm1560, %v1558
      %s1589 = smul.u32 14, %s19
      %p1590 = scmp.lt.s32.totalorder %s18, 1
      %s1591 = scalar_select %p1590, %s18, 1
      %p1592 = scmp.lt.s32.totalorder %s1589, 13
      %s1593 = scalar_select %p1592, %s1589, 13
      %s1594 = smul.addr %s1593, 2
      %s1595 = smul.addr %s1591, 28
      %s1596 = sadd.s32 %s1594, %s1595
      %s1597 = smul.addr %s1596, 8
      %s1598 = scalar_lea.vmem %s3, %s1597
      // Predicated region
      $region33: #{_lambda_.1} parent=31 // pred_check
        %p1599 = pneg %p114
      $region34: #{_lambda_.1} parent=31 // pred_check_branch
        %1601 = sbr.rel (%p1599) target = $region36
      $region35: #{_lambda_.1} parent=31 // pred_region
        %s1602 = smul.u32 14, %s19
      $region36: #{_lambda_.1} parent=31 // pred_fallthru
        _
    $region32: #{_lambda_.1} parent=5 // pred_fallthru
      _
    %p1603 = scmp.le.s32.totalorder 2, %s9
    // Predicated region
    $region37: #{_lambda_.1} parent=5 // pred_check
      %p1604 = pneg %p1603
    $region38: #{_lambda_.1} parent=5 // pred_check_branch
      %1606 = sbr.rel (%p1604) target = $region40
    $region39: #{_lambda_.1} parent=5 // pred_region
      %s1607 = ssub.s32 %s9, 2
      // Predicated region
      $region41: #{_lambda_.1} parent=39 // pred_check
        %p1608 = pneg %p120
      $region42: #{_lambda_.1} parent=39 // pred_check_branch
        %1610 = sbr.rel (%p1608) target = $region44
      $region43: #{_lambda_.1} parent=39 // pred_region
        %s1611 = smul.u32 14, %s21
        %p1612 = scmp.lt.s32.totalorder %s20, 1
        %s1613 = scalar_select %p1612, %s20, 1
        %p1614 = scmp.lt.s32.totalorder %s1611, 13
        %s1615 = scalar_select %p1614, %s1611, 13
        %s1616 = smul.addr %s1615, 2
        %s1617 = smul.addr %s1613, 28
        %s1618 = sadd.s32 %s1616, %s1617
        %s1619 = smul.addr %s1618, 8
        %s1620 = scalar_lea.vmem %s3, %s1619
      $region44: #{_lambda_.1} parent=39 // pred_fallthru
        _
    $region40: #{_lambda_.1} parent=5 // pred_fallthru
      _
  $region6: #{_lambda_.1} parent=0 // loop_footer
    %s13 = sadd.s32 1, %s9
  $region7: #{_lambda_.1} parent=0 // loop_footer_branch
    %8 = sbr.rel target = $region3
  $region8: #{_lambda_.1} parent=0 // loop_exit
    _

</llo_original>
